<compile_context>
chip_gen: v6e
topology: v6e:2x2x1
jax: 0.10.0
libtpu: 0.0.40
codegen_flags: <defaults>
</compile_context>

<pallas_src>
import functools

import jax
import jax.numpy as jnp
from jax import lax
from jax.experimental import pallas as pl
from jax.experimental.pallas import tpu as pltpu

STATE_DIM = 3
HIDDEN_DIM = 64
ACTION_DIM = 1
ACTION_BOUND = 2.0


def _policy_kernel(xa_ref, p_ref, o_ref, *, aug_dim, action_bound,
                   lane_chunk, num_chunks):
    """xa_ref: (S+1, TB)  states (+ ones row), batch on the lane axis.
       p_ref : (H, S+3)   packed params: [:, :S+1] = [w1^T | b1] (bias folded),
                          [:, S+1] = w2[:, 0], [:, S+2] = b2 (broadcast).
       o_ref : (1, TB)    lane-dense action output."""
    w1b = p_ref[:, 0:aug_dim]                       # (H, S+1) = [w1^T | b1]
    w2c = p_ref[:, aug_dim:aug_dim + 1]             # (H, 1)
    b2 = p_ref[0:1, aug_dim + 1:aug_dim + 2]        # (1, 1)

    def compute(xa):
        # fc1 (+ folded bias) + relu: single MXU matmul, f32 accumulation.
        h = jnp.maximum(
            jnp.dot(w1b, xa, preferred_element_type=jnp.float32), 0.0)
        # fc2 on the MXU (contraction over the feature/sublane axis) -> (1, LC).
        y = lax.dot_general(w2c, h, (((0,), (0,)), ((), ())),
                            preferred_element_type=jnp.float32)
        # tanh (EUP) * action_bound; lane-dense result.
        return (jnp.tanh(y + b2) * action_bound).astype(o_ref.dtype)

    if num_chunks == 1:
        o_ref[...] = compute(xa_ref[...])
    else:
        # Chunk over lane sub-blocks so the (H, lane_chunk) intermediate stays
        # hot in VMEM instead of round-tripping a (H, batch_tile) slab.
        def body(c, carry):
            j = pl.multiple_of(c * lane_chunk, lane_chunk)
            o_ref[:, pl.ds(j, lane_chunk)] = compute(
                xa_ref[:, pl.ds(j, lane_chunk)])
            return carry
        lax.fori_loop(0, num_chunks, body, 0, unroll=True)


def pack_params(w1, b1, w2, b2):
    """Pack (w1, b1, w2, b2) into one (H, S+3) f32 buffer (single operand DMA).
    Layout: [:, :S] = w1^T, [:, S] = b1 (so [:, :S+1] is the folded fc1 slab),
            [:, S+1] = w2[:, 0], [:, S+2] = b2 broadcast.
    Call once per parameter update, not per forward."""
    S, H = w1.shape
    A = w2.shape[1]
    # TODO(synk): fc2 is specialized to action_dim == 1 (Pendulum); for A > 1
    # it would need a (H, A) weight slab and a second matmul.
    assert A == 1, "fc2 is specialized to action_dim == 1"
    return jnp.concatenate(
        [w1.T.astype(jnp.float32),                                  # (H, S)
         b1.reshape(H, 1).astype(jnp.float32),                      # (H, 1)
         w2.reshape(H, 1).astype(jnp.float32),                      # (H, 1)
         jnp.broadcast_to(jnp.asarray(b2, jnp.float32).reshape(1, 1), (H, 1))],
        axis=1)                                                     # (H, S+3)


def policy_net_forward_slab(xa, packed, *, action_bound=ACTION_BOUND,
                            batch_tile=32768, lane_chunk=2048):
    """Fast path: xa is the pre-laid-out (S+1, B) slab (last row == 1.0),
    packed is pack_params(...).  Returns a lane-dense (1, B) action slab."""
    aug_dim, B = xa.shape
    H, W = packed.shape
    assert W == aug_dim + 2, "packed buffer does not match state_dim"

    if B <= batch_tile:
        # Tiny problem: gridless full-block call, everything resident in VMEM,
        # no pipelining machinery / per-step overhead.  (Single TC on v7x.)
        kernel = functools.partial(
            _policy_kernel, aug_dim=aug_dim, action_bound=float(action_bound),
            lane_chunk=B, num_chunks=1)
        return pl.pallas_call(
            kernel,
            out_shape=jax.ShapeDtypeStruct((1, B), jnp.float32),
            in_specs=[pl.BlockSpec(memory_space=pltpu.MemorySpace.VMEM),
                      pl.BlockSpec(memory_space=pltpu.MemorySpace.VMEM)],
            out_specs=pl.BlockSpec(memory_space=pltpu.MemorySpace.VMEM),
        )(xa, packed)

    # Rollout-sized batches: tile only the batch (lane) axis; weights are one
    # small block revisited every step.  No wrapper-side padding: Pallas masks
    # the partial last block's writeback, and garbage tail lanes cannot
    # contaminate valid lanes (reduction is over the sublane axis only).
    assert batch_tile % 128 == 0
    assert batch_tile % lane_chunk == 0 and lane_chunk % 128 == 0
    num_chunks = batch_tile // lane_chunk
    kernel = functools.partial(
        _policy_kernel, aug_dim=aug_dim, action_bound=float(action_bound),
        lane_chunk=lane_chunk, num_chunks=num_chunks)
    # TODO(synk): on v7x, verify "parallel" actually core-shards the batch
    # axis; if not, switch this axis to pltpu.CORE_PARALLEL / pl.core_map.
    return pl.pallas_call(
        kernel,
        out_shape=jax.ShapeDtypeStruct((1, B), jnp.float32),
        grid=(pl.cdiv(B, batch_tile),),
        in_specs=[pl.BlockSpec((aug_dim, batch_tile), lambda i: (0, i)),
                  pl.BlockSpec((H, W), lambda i: (0, 0))],
        out_specs=pl.BlockSpec((1, batch_tile), lambda i: (0, i)),
        compiler_params=pltpu.CompilerParams(
            dimension_semantics=("parallel",)),
    )(xa, packed)


def policy_net_forward(x, packed, *, action_bound=ACTION_BOUND,
                       batch_tile=32768, lane_chunk=2048):
    """PyTorch-layout convenience wrapper: x is (B, S) -> (B, 1).

    The single relayout below (transpose + ones row, one XLA op) should be
    hoisted into the producer of x when possible; callers that can emit the
    (S+1, B) slab directly should use policy_net_forward_slab."""
    B, S = x.shape
    xa = jnp.concatenate(
        [x.astype(jnp.float32).T, jnp.ones((1, B), jnp.float32)], axis=0)
    out = policy_net_forward_slab(xa, packed, action_bound=action_bound,
                                  batch_tile=batch_tile, lane_chunk=lane_chunk)
    return out.reshape(B, ACTION_DIM)


def _torch_linear_init(key, fan_in, fan_out):
    """Deterministic init mimicking torch.nn.Linear (U[-1/sqrt(fan_in), +])."""
    kw, kb = jax.random.split(key)
    bound = 1.0 / jnp.sqrt(jnp.float32(fan_in))
    w = jax.random.uniform(kw, (fan_in, fan_out), jnp.float32, -bound, bound)
    b = jax.random.uniform(kb, (fan_out,), jnp.float32, -bound, bound)
    return w, b


def _reference(x, w1, b1, w2, b2):
    return jnp.tanh(jnp.maximum(x @ w1 + b1, 0.0) @ w2 + b2) * ACTION_BOUND


if __name__ == "__main__":
    key = jax.random.PRNGKey(0)
    k_x, k_x2, k_fc1, k_fc2 = jax.random.split(key, 4)

    w1, b1 = _torch_linear_init(k_fc1, STATE_DIM, HIDDEN_DIM)
    w2, b2 = _torch_linear_init(k_fc2, HIDDEN_DIM, ACTION_DIM)

    # Pack parameters ONCE (hoisted out of the forward, per perf feedback).
    packed = jax.block_until_ready(pack_params(w1, b1, w2, b2))

    # Small batch -> gridless full-VMEM path.
    batch = 8
    x = jax.random.normal(k_x, (batch, STATE_DIM), jnp.float32)
    out = jax.block_until_ready(policy_net_forward(x, packed))
    assert out.shape == (batch, ACTION_DIM)
    assert jnp.allclose(out, _reference(x, w1, b1, w2, b2), atol=1e-5, rtol=1e-5)

    # Larger ragged batch -> batch-tiled grid path with an in-kernel lane-chunk
    # loop and a masked partial last block (no wrapper-side pad/slice).
    batch2 = 300
    x2 = jax.random.normal(k_x2, (batch2, STATE_DIM), jnp.float32)
    out2 = jax.block_until_ready(
        policy_net_forward(x2, packed, batch_tile=256, lane_chunk=128))
    assert out2.shape == (batch2, ACTION_DIM)
    assert jnp.allclose(out2, _reference(x2, w1, b1, w2, b2),
                        atol=1e-5, rtol=1e-5)

    print("KERNEL_OK")
</pallas_src>

<mosaic_0001>
module attributes {stable_mosaic.version = 11 : i64} {
  func.func @_policy_kernel(%arg0: memref<4x8xf32, #tpu.memory_space<vmem>>, %arg1: memref<64x6xf32, #tpu.memory_space<vmem>>, %arg2: memref<1x8xf32, #tpu.memory_space<vmem>>) attributes {dimension_semantics = [], scalar_prefetch = 0 : i64, scratch_operands = 0 : i64, tpu.core_type = #tpu.core_type<tc>} {
    %c0 = arith.constant 0 : index
    %c0_0 = arith.constant 0 : index
    %0 = vector.load %arg1[%c0, %c0_0] : memref<64x6xf32, #tpu.memory_space<vmem>>, vector<64x4xf32>
    %c0_1 = arith.constant 0 : index
    %c4 = arith.constant 4 : index
    %1 = vector.load %arg1[%c0_1, %c4] : memref<64x6xf32, #tpu.memory_space<vmem>>, vector<64x1xf32>
    %c0_2 = arith.constant 0 : index
    %c5 = arith.constant 5 : index
    %2 = vector.load %arg1[%c0_2, %c5] : memref<64x6xf32, #tpu.memory_space<vmem>>, vector<1x1xf32>
    %c0_3 = arith.constant 0 : index
    %c0_4 = arith.constant 0 : index
    %3 = vector.load %arg0[%c0_3, %c0_4] : memref<4x8xf32, #tpu.memory_space<vmem>>, vector<4x8xf32>
    %cst = arith.constant dense<0.000000e+00> : vector<64x8xf32>
    %4 = tpu.matmul %0, %3, %cst {dimension_numbers = #tpu.dot_dimension_numbers<[1], [0], [0], [1], [0, 0, 1, 1], [], []>} : vector<64x4xf32>, vector<4x8xf32>, vector<64x8xf32> -> vector<64x8xf32>
    %cst_5 = arith.constant 0.000000e+00 : f32
    %5 = vector.broadcast %cst_5 : f32 to vector<64x8xf32>
    %6 = arith.maximumf %4, %5 : vector<64x8xf32>
    %cst_6 = arith.constant dense<0.000000e+00> : vector<1x8xf32>
    %7 = tpu.matmul %1, %6, %cst_6 {dimension_numbers = #tpu.dot_dimension_numbers<[0], [0], [1], [1], [0, 1, 1, 1], [], []>} : vector<64x1xf32>, vector<64x8xf32>, vector<1x8xf32> -> vector<1x8xf32>
    %8 = vector.broadcast %2 : vector<1x1xf32> to vector<1x8xf32>
    %9 = arith.addf %7, %8 : vector<1x8xf32>
    %10 = math.tanh %9 : vector<1x8xf32>
    %cst_7 = arith.constant 2.000000e+00 : f32
    %11 = vector.broadcast %cst_7 : f32 to vector<1x8xf32>
    %12 = arith.mulf %10, %11 : vector<1x8xf32>
    %c0_8 = arith.constant 0 : index
    %c0_9 = arith.constant 0 : index
    %13 = vector.load %arg2[%c0_8, %c0_9] : memref<1x8xf32, #tpu.memory_space<vmem>>, vector<1x8xf32>
    tpu.vector_store %arg2[%c0_8, %c0_9], %12 {strides = array<i32>} : memref<1x8xf32, #tpu.memory_space<vmem>>, vector<1x8xf32>,
    return
  }
}

</mosaic_0001>

<llo_original>
// kernel: tpu_custom_call.1
$region0: #{tpu_custom_call.1}
  #allocation0 [shape = 'u32[]', space=smem, size = 0x4, offset = 0x4, fixed_abs, tag = 'smem constant byte address 0x4 - core index']
  #allocation1 [shape = 'u32[144,128]{1,0:T(1,128)}', space=vmem, size = 0x12000, scoped, tag = 'internal scratch']
  %s0 = inlined_call_operand.vmem [shape: f32[4,8], index: 0, kind: input, shape index: {}]
  %s1 = inlined_call_operand.vmem [shape: f32[64,6], index: 1, kind: input, shape index: {}]
  %s2 = inlined_call_operand.hbm [shape: f32[1,8], index: 2, kind: output, shape index: {}]
  %s3 = sld [smem:[#allocation0]]
  $region18: #{tpu_custom_call.1} parent=0
    _
  %s5 = ssub.s32 1, %s3
  %s6 = scalar_select 0, %s5, %s3
  $region1: #{tpu_custom_call.1} parent=0
    #allocation2 [shape = 'u8[512]{0}', space=vmem, size = 0x400, scoped, tag = 'output window, operand 0, single buffered']
    #allocation3 [shape = 's32[1]{0}', space=sflag, size = 0x4, scoped, tag = 'scoped memory for tpu_custom_call.1']
    %7 = vsyncpa [#allocation3], 0
    // Predicated region
    $region2: #{tpu_custom_call.1} parent=1 // pred_check
      _
    $region3: #{tpu_custom_call.1} parent=1 // pred_check_branch
      %9 = sbr.rel (0) target = $region5
    $region4: #{tpu_custom_call.1} parent=1 // pred_region
      _
    $region5: #{tpu_custom_call.1} parent=1 // pred_fallthru
      _
    // Predicated region
    $region6: #{tpu_custom_call.1} parent=1 // pred_check
      _
    $region7: #{tpu_custom_call.1} parent=1 // pred_check_branch
      %11 = sbr.rel (0) target = $region9
    $region8: #{tpu_custom_call.1} parent=1 // pred_region
      _
    $region9: #{tpu_custom_call.1} parent=1 // pred_fallthru
      _
    %v12 = vld [vmem:[%s1] sm:$0xff]
    %v13 = vld [vmem:[%s1 + $0x8] sm:$0xff]
    %v14 = vld [vmem:[%s1 + $0x10] sm:$0xff]
    %v15 = vld [vmem:[%s1 + $0x18] sm:$0xff]
    %v16 = vld [vmem:[%s1 + $0x20] sm:$0xff]
    %v17 = vld [vmem:[%s1 + $0x28] sm:$0xff]
    %v18 = vld [vmem:[%s1 + $0x30] sm:$0xff]
    %v19 = vld [vmem:[%s1 + $0x38] sm:$0xff]
    %v20 = vld [vmem:[%s1] sm:$0x1]
    %v21 = vld [vmem:[%s0] sm:$0xf]
    %vm22 = vcmask 31744
    %v24 = vsel %vm22, %v12, 0
    %v27 = vsel %vm22, %v13, 0
    %v30 = vsel %vm22, %v14, 0
    %v33 = vsel %vm22, %v15, 0
    %v36 = vsel %vm22, %v16, 0
    %v39 = vsel %vm22, %v17, 0
    %v42 = vsel %vm22, %v18, 0
    %v45 = vsel %vm22, %v19, 0
    %vm47 = vcmask 1043456
    %v49 = vsel %vm47, %v21, 0
    %51 = vmatprep.subr.mxu0 0.0
    %52 = vmatpush1.msra.mxu0 0.0
    %53 = vmatprep.subr.mxu0 0.0
    %54 = vmatpush1.msra.mxu0 0.0
    %55 = vmatprep.subr.mxu0 0.0
    %56 = vmatpush1.msra.mxu0 0.0
    %57 = vmatprep.subr.mxu0 0.0
    %58 = vmatpush1.msra.mxu0 0.0
    %59 = vmatprep.subr.mxu0 0.0
    %60 = vmatpush1.msra.mxu0 0.0
    %61 = vmatprep.subr.mxu0 0.0
    %62 = vmatpush1.msra.mxu0 0.0
    %63 = vmatprep.subr.mxu0 0.0
    %64 = vmatpush1.msra.mxu0 0.0
    %65 = vmatprep.subr.mxu0 0.0
    %66 = vmatpush1.msra.mxu0 0.0
    %67 = vmatprep.subr.mxu0 0.0
    %68 = vmatpush1.msra.mxu0 0.0
    %69 = vmatprep.subr.mxu0 0.0
    %70 = vmatpush1.msra.mxu0 0.0
    %71 = vmatprep.subr.mxu0 0.0
    %72 = vmatpush1.msra.mxu0 0.0
    %73 = vmatprep.subr.mxu0 0.0
    %74 = vmatpush1.msra.mxu0 0.0
    %75 = vmatprep.subr.mxu0 0.0
    %76 = vmatpush1.msra.mxu0 0.0
    %77 = vmatprep.subr.mxu0 0.0
    %78 = vmatpush1.msra.mxu0 0.0
    %79 = vmatprep.subr.mxu0 0.0
    %80 = vmatpush1.msra.mxu0 0.0
    %81 = vmatprep.subr.mxu0 0.0
    %82 = vmatpush1.msra.mxu0 %v49
    %83 = vmatprep.subr.mxu0 0.0
    %84 = vmatpush2.msra.mxu0 0.0
    %85 = vmatprep.subr.mxu0 0.0
    %86 = vmatpush2.msra.mxu0 0.0
    %87 = vmatprep.subr.mxu0 0.0
    %88 = vmatpush2.msra.mxu0 0.0
    %89 = vmatprep.subr.mxu0 0.0
    %90 = vmatpush2.msra.mxu0 0.0
    %91 = vmatprep.subr.mxu0 0.0
    %92 = vmatpush2.msra.mxu0 0.0
    %93 = vmatprep.subr.mxu0 0.0
    %94 = vmatpush2.msra.mxu0 0.0
    %95 = vmatprep.subr.mxu0 0.0
    %96 = vmatpush2.msra.mxu0 0.0
    %97 = vmatprep.subr.mxu0 0.0
    %98 = vmatpush2.msra.mxu0 0.0
    %99 = vmatprep.subr.mxu0 0.0
    %100 = vmatpush2.msra.mxu0 0.0
    %101 = vmatprep.subr.mxu0 0.0
    %102 = vmatpush2.msra.mxu0 0.0
    %103 = vmatprep.subr.mxu0 0.0
    %104 = vmatpush2.msra.mxu0 0.0
    %105 = vmatprep.subr.mxu0 0.0
    %106 = vmatpush2.msra.mxu0 0.0
    %107 = vmatprep.subr.mxu0 0.0
    %108 = vmatpush2.msra.mxu0 0.0
    %109 = vmatprep.subr.mxu0 0.0
    %110 = vmatpush2.msra.mxu0 0.0
    %111 = vmatprep.subr.mxu0 0.0
    %112 = vmatpush2.msra.mxu0 0.0
    %113 = vmatprep.subr.mxu0 0.0
    %114 = vmatpush2.msra.mxu0 0.0
    %115 = vmatprep.mubr.f32.mxu0 0.0
    %116 = vmatmul.mubr.f32.gmra.mxu0 %v24
    %v117 = vpop.f32.mrf.mxu0
    %v118 = vadd.f32 0.0, %v117
    %v119 = vpop.f32.mrf.mxu0
    %120 = vmatprep.mubr.f32.mxu0 0.0
    %121 = vmatmul.mubr.f32.gmra.mxu0 %v27
    %v122 = vpop.f32.mrf.mxu0
    %v123 = vadd.f32 0.0, %v122
    %v124 = vpop.f32.mrf.mxu0
    %125 = vmatprep.mubr.f32.mxu0 0.0
    %126 = vmatmul.mubr.f32.gmra.mxu0 %v30
    %v127 = vpop.f32.mrf.mxu0
    %v128 = vadd.f32 0.0, %v127
    %v129 = vpop.f32.mrf.mxu0
    %130 = vmatprep.mubr.f32.mxu0 0.0
    %131 = vmatmul.mubr.f32.gmra.mxu0 %v33
    %v132 = vpop.f32.mrf.mxu0
    %v133 = vadd.f32 0.0, %v132
    %v134 = vpop.f32.mrf.mxu0
    %135 = vmatprep.mubr.f32.mxu0 0.0
    %136 = vmatmul.mubr.f32.gmra.mxu0 %v36
    %v137 = vpop.f32.mrf.mxu0
    %v138 = vadd.f32 0.0, %v137
    %v139 = vpop.f32.mrf.mxu0
    %140 = vmatprep.mubr.f32.mxu0 0.0
    %141 = vmatmul.mubr.f32.gmra.mxu0 %v39
    %v142 = vpop.f32.mrf.mxu0
    %v143 = vadd.f32 0.0, %v142
    %v144 = vpop.f32.mrf.mxu0
    %145 = vmatprep.mubr.f32.mxu0 0.0
    %146 = vmatmul.mubr.f32.gmra.mxu0 %v42
    %v147 = vpop.f32.mrf.mxu0
    %v148 = vadd.f32 0.0, %v147
    %v149 = vpop.f32.mrf.mxu0
    %150 = vmatprep.mubr.f32.mxu0 0.0
    %151 = vmatmul.mubr.f32.gmra.mxu0 %v45
    %v152 = vpop.f32.mrf.mxu0
    %v153 = vadd.f32 0.0, %v152
    %v154 = vpop.f32.mrf.mxu0
    %155 = vdwg.mxu0
    %v156 = vmax.f32 %v118, 0.0
    %v157 = vmax.f32 %v123, 0.0
    %v158 = vmax.f32 %v128, 0.0
    %v159 = vmax.f32 %v133, 0.0
    %v160 = vmax.f32 %v138, 0.0
    %v161 = vmax.f32 %v143, 0.0
    %v162 = vmax.f32 %v148, 0.0
    %v163 = vmax.f32 %v153, 0.0
    %165 = vset.pattern.permute.xlu0 5
    %166 = vperm.xlu0 %165, %v20
    %v167 = vpop.permute.xlu0 %166
    %169 = vrot.lane.b32.xlu0 %v12, 124
    %v170 = vpop.permute.xlu0 %169
    %171 = vrot.lane.b32.xlu0 %v13, 124
    %v172 = vpop.permute.xlu0 %171
    %173 = vrot.lane.b32.xlu0 %v14, 124
    %v174 = vpop.permute.xlu0 %173
    %175 = vrot.lane.b32.xlu0 %v15, 124
    %v176 = vpop.permute.xlu0 %175
    %177 = vrot.lane.b32.xlu0 %v16, 124
    %v178 = vpop.permute.xlu0 %177
    %179 = vrot.lane.b32.xlu0 %v17, 124
    %v180 = vpop.permute.xlu0 %179
    %181 = vrot.lane.b32.xlu0 %v18, 124
    %v182 = vpop.permute.xlu0 %181
    %183 = vrot.lane.b32.xlu0 %v19, 124
    %v184 = vpop.permute.xlu0 %183
    %193 = vxpose.xlu0.b32.start [1/16] %v170, 128
    %194 = vxpose.xlu0.b32.cont [2/16] %v172, 128
    %195 = vxpose.xlu0.b32.cont [3/16] %v174, 128
    %196 = vxpose.xlu0.b32.cont [4/16] %v176, 128
    %197 = vxpose.xlu0.b32.cont [5/16] %v178, 128
    %198 = vxpose.xlu0.b32.cont [6/16] %v180, 128
    %199 = vxpose.xlu0.b32.cont [7/16] %v182, 128
    %200 = vxpose.xlu0.b32.cont [8/16] %v184, 128
    %201 = vxpose.xlu0.b32.cont [9/16] 0.0, 128
    %202 = vxpose.xlu0.b32.cont [10/16] 0.0, 128
    %203 = vxpose.xlu0.b32.cont [11/16] 0.0, 128
    %204 = vxpose.xlu0.b32.cont [12/16] 0.0, 128
    %205 = vxpose.xlu0.b32.cont [13/16] 0.0, 128
    %206 = vxpose.xlu0.b32.cont [14/16] 0.0, 128
    %207 = vxpose.xlu0.b32.cont [15/16] 0.0, 128
    %208 = vxpose.xlu0.b32.end [16/16] 0.0, 128
    %v209 = vpop.trf.xlu0
    %v210 = vpop.trf.xlu0
    %v211 = vpop.trf.xlu0
    %v212 = vpop.trf.xlu0
    %v213 = vpop.trf.xlu0
    %v214 = vpop.trf.xlu0
    %v215 = vpop.trf.xlu0
    %v216 = vpop.trf.xlu0
    %v217 = vpop.trf.xlu0
    %v218 = vpop.trf.xlu0
    %v219 = vpop.trf.xlu0
    %v220 = vpop.trf.xlu0
    %v221 = vpop.trf.xlu0
    %v222 = vpop.trf.xlu0
    %v223 = vpop.trf.xlu0
    %v224 = vpop.trf.xlu0
    %vm225 = vcmask 523264
    %v227 = vsel %vm225, %v209, 0
    %229 = vmatprep.subr.mxu0 0.0
    %230 = vmatpush1.msra.mxu0 0.0
    %231 = vmatprep.subr.mxu0 0.0
    %232 = vmatpush1.msra.mxu0 0.0
    %233 = vmatprep.subr.mxu0 0.0
    %234 = vmatpush1.msra.mxu0 0.0
    %235 = vmatprep.subr.mxu0 0.0
    %236 = vmatpush1.msra.mxu0 0.0
    %237 = vmatprep.subr.mxu0 0.0
    %238 = vmatpush1.msra.mxu0 0.0
    %239 = vmatprep.subr.mxu0 0.0
    %240 = vmatpush1.msra.mxu0 0.0
    %241 = vmatprep.subr.mxu0 0.0
    %242 = vmatpush1.msra.mxu0 0.0
    %243 = vmatprep.subr.mxu0 0.0
    %244 = vmatpush1.msra.mxu0 0.0
    %245 = vmatprep.subr.mxu0 0.0
    %246 = vmatpush1.msra.mxu0 %v163
    %247 = vmatprep.subr.mxu0 0.0
    %248 = vmatpush1.msra.mxu0 %v162
    %249 = vmatprep.subr.mxu0 0.0
    %250 = vmatpush1.msra.mxu0 %v161
    %251 = vmatprep.subr.mxu0 0.0
    %252 = vmatpush1.msra.mxu0 %v160
    %253 = vmatprep.subr.mxu0 0.0
    %254 = vmatpush1.msra.mxu0 %v159
    %255 = vmatprep.subr.mxu0 0.0
    %256 = vmatpush1.msra.mxu0 %v158
    %257 = vmatprep.subr.mxu0 0.0
    %258 = vmatpush1.msra.mxu0 %v157
    %259 = vmatprep.subr.mxu0 0.0
    %260 = vmatpush1.msra.mxu0 %v156
    %261 = vmatprep.subr.mxu0 0.0
    %262 = vmatpush2.msra.mxu0 0.0
    %263 = vmatprep.subr.mxu0 0.0
    %264 = vmatpush2.msra.mxu0 0.0
    %265 = vmatprep.subr.mxu0 0.0
    %266 = vmatpush2.msra.mxu0 0.0
    %267 = vmatprep.subr.mxu0 0.0
    %268 = vmatpush2.msra.mxu0 0.0
    %269 = vmatprep.subr.mxu0 0.0
    %270 = vmatpush2.msra.mxu0 0.0
    %271 = vmatprep.subr.mxu0 0.0
    %272 = vmatpush2.msra.mxu0 0.0
    %273 = vmatprep.subr.mxu0 0.0
    %274 = vmatpush2.msra.mxu0 0.0
    %275 = vmatprep.subr.mxu0 0.0
    %276 = vmatpush2.msra.mxu0 0.0
    %277 = vmatprep.subr.mxu0 0.0
    %278 = vmatpush2.msra.mxu0 0.0
    %279 = vmatprep.subr.mxu0 0.0
    %280 = vmatpush2.msra.mxu0 0.0
    %281 = vmatprep.subr.mxu0 0.0
    %282 = vmatpush2.msra.mxu0 0.0
    %283 = vmatprep.subr.mxu0 0.0
    %284 = vmatpush2.msra.mxu0 0.0
    %285 = vmatprep.subr.mxu0 0.0
    %286 = vmatpush2.msra.mxu0 0.0
    %287 = vmatprep.subr.mxu0 0.0
    %288 = vmatpush2.msra.mxu0 0.0
    %289 = vmatprep.subr.mxu0 0.0
    %290 = vmatpush2.msra.mxu0 0.0
    %291 = vmatprep.subr.mxu0 0.0
    %292 = vmatpush2.msra.mxu0 0.0
    %293 = vmatprep.mubr.f32.mxu0 0.0
    %294 = vmatmul.mubr.f32.gmra.mxu0 %v227
    %v295 = vpop.f32.mrf.mxu0
    %v296 = vadd.f32 %v167, %v295
    %v297 = vpop.f32.mrf.mxu0
    %298 = vdwg.mxu0
    %v299 = vtanh.pop %v296
    %v300 = vmul.f32 %v299, 2.0
    %vm301 = vcmask 57344
    %302 = vst.msk [vmem:[#allocation2] sm:$0x1] %vm301, %v300
    // Predicated region
    $region10: #{tpu_custom_call.1} parent=1 // pred_check
      _
    $region11: #{tpu_custom_call.1} parent=1 // pred_check_branch
      %304 = sbr.rel (0) target = $region13
    $region12: #{tpu_custom_call.1} parent=1 // pred_region
      %s306 = ssub.s32 16, 16
      %307 = vsyncadd [#allocation3], %s306
      %s309 = sshll.u32 [#allocation2], 4
      %s310 = int_to_ptr.vmem [resolvable:$true] %s309
      %312 = dma.vmem_to_hbm [thread:$0]  %s310, 16, %s2, [#allocation3]
    $region13: #{tpu_custom_call.1} parent=1 // pred_fallthru
      _
    // Predicated region
    $region14: #{tpu_custom_call.1} parent=1 // pred_check
      _
    $region15: #{tpu_custom_call.1} parent=1 // pred_check_branch
      %314 = sbr.rel (0) target = $region17
    $region16: #{tpu_custom_call.1} parent=1 // pred_region
      %315 = dma.done [#allocation3], 16
    $region17: #{tpu_custom_call.1} parent=1 // pred_fallthru
      _
    %316 = vsyncpa [#allocation3], 1

</llo_original>
